<compile_context>
chip_gen: v7x
topology: tpu7x:2x2x1
jax: 0.10.0
libtpu: 0.0.40
codegen_flags: <defaults>
</compile_context>

<pallas_src>
import functools
import math

import jax
import jax.numpy as jnp
from jax import lax
from jax.experimental import pallas as pl
from jax.experimental.pallas import tpu as pltpu


@functools.lru_cache(maxsize=None)
def _roll_matches_numpy():
    """One-time cached probe of the pltpu.roll direction convention.

    Guarantees the depthwise taps shift the correct way on the attached
    hardware; falls back to the np.roll convention (out[i] = x[i - shift])
    when no device is available (AOT / mock-TPU compile paths).
    """
    try:
        def k(x_ref, o_ref):
            o_ref[...] = pltpu.roll(x_ref[...], 17, 1)

        x = lax.broadcasted_iota(jnp.float32, (8, 256), 1)
        y = pl.pallas_call(
            k, out_shape=jax.ShapeDtypeStruct((8, 256), jnp.float32))(x)
        return bool(jnp.array_equal(y, jnp.roll(x, 17, axis=1)))
    except Exception:   # no TPU attached: pin the np.roll convention
        return True


def node_kernel(sw_ref, wbig_ref, bias_ref, *data_refs,
                num_edges, height, width, use_edge_weights, roll_np):
    x_refs = data_refs[:num_edges]          # each (Nb*C, HW), row = (n, c)
    o_ref = data_refs[num_edges]            # (Nb*Cout, HW)
    stack_ref = data_refs[num_edges + 1]    # (9*Nb*C, HW) f32 scratch
    G, HW = x_refs[0].shape                 # G = Nb*C
    H, W = height, width

    # 1) weighted aggregation over in-edges: sum_e x_e * sigmoid(w_e).
    #    sigmoid(w_e) are SMEM scalars via scalar prefetch (computed once in
    #    the wrapper).  Inputs may be stored bf16; compute is f32.
    if use_edge_weights:
        acc = x_refs[0][...].astype(jnp.float32) * sw_ref[0]
        for e in range(1, num_edges):
            acc = acc + x_refs[e][...].astype(jnp.float32) * sw_ref[e]
    else:
        acc = x_refs[0][...].astype(jnp.float32)

    # 2) ReLU
    a = jnp.maximum(acc, 0.0)

    # 3) 3x3 depthwise taps as 9 lane-rolled + boundary-masked copies of `a`
    #    stacked into (9*G, HW).  Separable structure: roll by +/-W once per
    #    row offset (mask once), then +/-1 per column offset.
    j = lax.broadcasted_iota(jnp.int32, (1, HW), 1)
    col = j % W
    row_valid = {-1: j >= W, 0: None, 1: j < (H - 1) * W}
    col_valid = {-1: col >= 1, 0: None, 1: col <= W - 2}

    def shift(v, s):                        # returns t with t[j] = v[j + s]
        if s == 0:
            return v
        amt = (-s) % HW if roll_np else s % HW
        return pltpu.roll(v, amt, 1)

    for dh in (-1, 0, 1):
        a_row = shift(a, dh * W)
        if row_valid[dh] is not None:
            a_row = jnp.where(row_valid[dh], a_row, 0.0)
        for dcol in (-1, 0, 1):
            t = shift(a_row, dcol)
            if col_valid[dcol] is not None:
                t = jnp.where(col_valid[dcol], t, 0.0)
            k = (dh + 1) * 3 + (dcol + 1)
            stack_ref[k * G:(k + 1) * G, :] = t

    # 4) one fused MXU contraction: the block-diagonal fused weight already
    #    folds depthwise taps, pointwise 1x1 weight and BN scale; the bias
    #    folds depthwise bias, pointwise bias and BN shift.  Dropout(0.2) is
    #    identity in eval mode.
    res = jnp.dot(wbig_ref[...], stack_ref[...],
                  preferred_element_type=jnp.float32)
    o_ref[...] = (res + bias_ref[...]).astype(o_ref.dtype)


def node_forward(edge_inputs, edge_logits, dw, db, pw, pb, bn_scale, bn_shift,
                 *, input_dtype=jnp.float32,
                 vmem_budget_bytes=12 * 1024 * 1024):
    """edge_inputs: list of NCHW float32 arrays (the *input of Node.forward).

    input_dtype: storage dtype of the edge inputs handed to the kernel; use
    jnp.bfloat16 on v6e/v7x to halve HBM reads (arithmetic stays f32).
    """
    E = len(edge_inputs)
    N, C, H, W = edge_inputs[0].shape
    HW = H * W
    Cout = pw.shape[1]
    in_item = jnp.dtype(input_dtype).itemsize

    # ---- choose how many images share one grid step (Nb), from an explicit
    #      VMEM budget (double-buffered inputs/outputs + tap stack + weight).
    def step_bytes(nb):
        edges = 2 * E * nb * C * HW * in_item
        outs = 2 * nb * Cout * HW * 4
        stack = 9 * nb * C * HW * 4
        wbig_b = 2 * (nb * Cout) * (9 * nb * C) * 4
        return edges + outs + stack + wbig_b

    nb = 1
    while nb < N and step_bytes(nb + 1) <= vmem_budget_bytes:
        nb += 1
    if nb < N:
        # When the batch is split, keep Nb*C a multiple of 8 so every block
        # (and every tap store) is sublane-tile aligned; otherwise collapse.
        m = 8 // math.gcd(C, 8)
        nb -= nb % m
        if nb == 0:
            nb = N
    # TODO(synk): on v7x (2 TensorCores) prefer >= 2 batch blocks when N > 1
    #             so both cores get work; single-TC v5e/v6e prefers 1 block.

    nblocks = -(-N // nb)
    n_pad = nblocks * nb
    G = nb * C

    # ---- inputs: free reshape NCHW -> (N*C, HW); pad batch only if needed.
    xs = []
    for x in edge_inputs:
        x2 = x.astype(input_dtype).reshape(N * C, HW)
        if n_pad != N:
            x2 = jnp.pad(x2, ((0, (n_pad - N) * C), (0, 0)))
        xs.append(x2)

    # ---- scalar-prefetch operand: sigmoid(edge weights), one f32 per edge.
    sw = (jax.nn.sigmoid(edge_logits.astype(jnp.float32)) if E > 1
          else jnp.ones((1,), jnp.float32))

    # ---- fold depthwise taps + pointwise weight + BN scale into a single
    #      block-diagonal (Nb*Cout, 9*Nb*C) fused weight; fold depthwise bias,
    #      pointwise bias and BN shift into one per-row bias.
    dw32 = dw.astype(jnp.float32).reshape(9, C)         # [k, c], k = kh*3+kw
    pw32 = pw.astype(jnp.float32)                       # [c, o]
    s32 = bn_scale.astype(jnp.float32)                  # [o]
    wf = jnp.einsum('o,co,kc->okc', s32, pw32, dw32)    # [o, k, c]
    wbig = jnp.einsum('nm,okc->nokmc', jnp.eye(nb, dtype=jnp.float32), wf)
    wbig = wbig.reshape(nb * Cout, 9 * nb * C)
    bias = (s32 * (pb.astype(jnp.float32) + db.astype(jnp.float32) @ pw32)
            + bn_shift.astype(jnp.float32))
    bias_big = jnp.tile(bias, nb).reshape(nb * Cout, 1)

    kernel = functools.partial(
        node_kernel, num_edges=E, height=H, width=W,
        use_edge_weights=(E > 1), roll_np=_roll_matches_numpy())

    def const_spec(shape):
        zeros = (0,) * len(shape)
        return pl.BlockSpec(shape, lambda b, sw_ref, _z=zeros: _z)

    x_spec = pl.BlockSpec((G, HW), lambda b, sw_ref: (b, 0))

    # TODO(synk): if HW is not a multiple of 128 (small feature maps) the
    #             output stores become masked; pack batch onto lanes there.
    out = pl.pallas_call(
        kernel,
        out_shape=jax.ShapeDtypeStruct((n_pad * Cout, HW), jnp.float32),
        grid_spec=pltpu.PrefetchScalarGridSpec(
            num_scalar_prefetch=1,
            grid=(nblocks,),
            in_specs=[const_spec((nb * Cout, 9 * nb * C)),   # fused weight
                      const_spec((nb * Cout, 1))]            # fused bias
                     + [x_spec] * E,                         # edge inputs
            out_specs=pl.BlockSpec((nb * Cout, HW), lambda b, sw_ref: (b, 0)),
            scratch_shapes=[pltpu.VMEM((9 * G, HW), jnp.float32)],
        ),
        compiler_params=pltpu.CompilerParams(
            dimension_semantics=("parallel",),
            vmem_limit_bytes=32 * 1024 * 1024),
    )(sw, wbig, bias_big, *xs)

    out = out.reshape(n_pad, Cout, H, W)        # free reshape back to NCHW
    return out[:N] if n_pad != N else out


def node_ref(edge_inputs, edge_logits, dw, db, pw, pb, bn_scale, bn_shift):
    """Pure-JAX reference (uses lax.conv) for correctness checking."""
    E = len(edge_inputs)
    if E > 1:
        s = jax.nn.sigmoid(edge_logits)
        x = edge_inputs[0] * s[0]
        for i in range(1, E):
            x = x + edge_inputs[i] * s[i]
    else:
        x = edge_inputs[0]
    x = jax.nn.relu(x)
    xh = jnp.transpose(x, (0, 2, 3, 1))                       # NHWC
    C = xh.shape[-1]
    y = lax.conv_general_dilated(
        xh, dw[:, :, None, :], (1, 1), 'SAME',
        feature_group_count=C,
        dimension_numbers=('NHWC', 'HWIO', 'NHWC'))
    y = y + db
    y = jnp.einsum('nhwc,cd->nhwd', y, pw) + pb
    y = y * bn_scale + bn_shift
    return jnp.transpose(y, (0, 3, 1, 2))                     # NCHW


if __name__ == "__main__":
    E, N, C, H, W, Cout = 3, 2, 4, 16, 16, 8

    key = jax.random.PRNGKey(0)
    keys = jax.random.split(key, 10)

    # Node.forward inputs (one tensor per in-edge), NCHW like PyTorch.
    edge_inputs = [jax.random.normal(keys[i], (N, C, H, W), jnp.float32)
                   for i in range(E)]

    # Parameters (matching the module's __init__ shapes).
    edge_logits = jnp.ones((E,), jnp.float32)                 # torch.ones(E)
    dw = 0.1 * jax.random.normal(keys[3], (3, 3, C), jnp.float32)   # depthwise
    db = 0.1 * jax.random.normal(keys[4], (C,), jnp.float32)
    pw = 0.1 * jax.random.normal(keys[5], (C, Cout), jnp.float32)   # pointwise
    pb = 0.1 * jax.random.normal(keys[6], (Cout,), jnp.float32)
    gamma = 1.0 + 0.1 * jax.random.normal(keys[7], (Cout,), jnp.float32)
    beta = 0.1 * jax.random.normal(keys[8], (Cout,), jnp.float32)
    running_mean = jnp.zeros((Cout,), jnp.float32)
    running_var = jnp.ones((Cout,), jnp.float32)
    eps = 1e-5
    bn_scale = gamma / jnp.sqrt(running_var + eps)
    bn_shift = beta - running_mean * bn_scale

    out = node_forward(edge_inputs, edge_logits, dw, db, pw, pb,
                       bn_scale, bn_shift)
    out = jax.block_until_ready(out)

    ref = node_ref(edge_inputs, edge_logits, dw, db, pw, pb,
                   bn_scale, bn_shift)
    ref = jax.block_until_ready(ref)

    assert out.shape == (N, Cout, H, W), out.shape
    assert jnp.allclose(out, ref, atol=1e-4, rtol=1e-4), float(
        jnp.max(jnp.abs(out - ref)))
    print("KERNEL_OK")
</pallas_src>

<mosaic_0001>
module attributes {stable_mosaic.version = 11 : i64} {
  func.func @k(%arg0: memref<8x256xf32, #tpu.memory_space<vmem>>, %arg1: memref<8x256xf32, #tpu.memory_space<vmem>>) attributes {dimension_semantics = [], scalar_prefetch = 0 : i64, scratch_operands = 0 : i64, tpu.core_type = #tpu.core_type<tc>} {
    %c0 = arith.constant 0 : index
    %c0_0 = arith.constant 0 : index
    %0 = vector.load %arg0[%c0, %c0_0] : memref<8x256xf32, #tpu.memory_space<vmem>>, vector<8x256xf32>
    %c17_i32 = arith.constant 17 : i32
    %1 = tpu.dynamic_rotate %0 by %c17_i32 dim 1 : vector<8x256xf32>, i32 -> vector<8x256xf32>
    %c0_1 = arith.constant 0 : index
    %c0_2 = arith.constant 0 : index
    %2 = vector.load %arg1[%c0_1, %c0_2] : memref<8x256xf32, #tpu.memory_space<vmem>>, vector<8x256xf32>
    tpu.vector_store %arg1[%c0_1, %c0_2], %1 {strides = array<i32>} : memref<8x256xf32, #tpu.memory_space<vmem>>, vector<8x256xf32>,
    return
  }
}

module attributes {stable_mosaic.version = 11 : i64} {
  func.func @node_kernel(%arg0: i32, %arg1: memref<3xf32, #tpu.memory_space<smem>>, %arg2: memref<16x72xf32, #tpu.memory_space<vmem>>, %arg3: memref<16x1xf32, #tpu.memory_space<vmem>>, %arg4: memref<8x256xf32, #tpu.memory_space<vmem>>, %arg5: memref<8x256xf32, #tpu.memory_space<vmem>>, %arg6: memref<8x256xf32, #tpu.memory_space<vmem>>, %arg7: memref<16x256xf32, #tpu.memory_space<vmem>>, %arg8: memref<72x256xf32, #tpu.memory_space<vmem>>) attributes {dimension_semantics = [#tpu.dimension_semantics<parallel>], iteration_bounds = array<i64: 1>, scalar_prefetch = 1 : i64, scratch_operands = 1 : i64, tpu.core_type = #tpu.core_type<tc>, window_params = [{pipeline_mode = #tpu.pipeline_mode<synchronous>, transform_indices = @transform_0, window_bounds = array<i64: 16, 72>}, {pipeline_mode = #tpu.pipeline_mode<synchronous>, transform_indices = @transform_1, window_bounds = array<i64: 16, 1>}, {transform_indices = @transform_2, window_bounds = array<i64: 8, 256>}, {transform_indices = @transform_3, window_bounds = array<i64: 8, 256>}, {transform_indices = @transform_4, window_bounds = array<i64: 8, 256>}, {transform_indices = @transform_5, window_bounds = array<i64: 16, 256>}]} {
    %c0 = arith.constant 0 : index
    %c0_0 = arith.constant 0 : index
    %0 = vector.load %arg4[%c0, %c0_0] : memref<8x256xf32, #tpu.memory_space<vmem>>, vector<8x256xf32>
    %c0_1 = arith.constant 0 : index
    %1 = memref.load %arg1[%c0_1] : memref<3xf32, #tpu.memory_space<smem>>
    %2 = vector.broadcast %1 : f32 to vector<8x256xf32>
    %3 = arith.mulf %0, %2 : vector<8x256xf32>
    %c0_2 = arith.constant 0 : index
    %c0_3 = arith.constant 0 : index
    %4 = vector.load %arg5[%c0_2, %c0_3] : memref<8x256xf32, #tpu.memory_space<vmem>>, vector<8x256xf32>
    %c1 = arith.constant 1 : index
    %5 = memref.load %arg1[%c1] : memref<3xf32, #tpu.memory_space<smem>>
    %6 = vector.broadcast %5 : f32 to vector<8x256xf32>
    %7 = arith.mulf %4, %6 : vector<8x256xf32>
    %8 = arith.addf %3, %7 : vector<8x256xf32>
    %c0_4 = arith.constant 0 : index
    %c0_5 = arith.constant 0 : index
    %9 = vector.load %arg6[%c0_4, %c0_5] : memref<8x256xf32, #tpu.memory_space<vmem>>, vector<8x256xf32>
    %c2 = arith.constant 2 : index
    %10 = memref.load %arg1[%c2] : memref<3xf32, #tpu.memory_space<smem>>
    %11 = vector.broadcast %10 : f32 to vector<8x256xf32>
    %12 = arith.mulf %9, %11 : vector<8x256xf32>
    %13 = arith.addf %8, %12 : vector<8x256xf32>
    %cst = arith.constant 0.000000e+00 : f32
    %14 = vector.broadcast %cst : f32 to vector<8x256xf32>
    %15 = arith.maximumf %13, %14 : vector<8x256xf32>
    %16 = tpu.iota {dimensions = array<i32: 1>} : vector<1x256xi32>
    %c16_i32 = arith.constant 16 : i32
    %c0_i32 = arith.constant 0 : i32
    %17 = arith.cmpi eq, %c16_i32, %c0_i32 : i32
    %c1_i32 = arith.constant 1 : i32
    %18 = arith.select %17, %c1_i32, %c16_i32 : i32
    %19 = vector.broadcast %18 : i32 to vector<1x256xi32>
    %20 = arith.remsi %16, %19 : vector<1x256xi32>
    %c0_i32_6 = arith.constant 0 : i32
    %21 = vector.broadcast %c0_i32_6 : i32 to vector<1x256xi32>
    %22 = arith.cmpi ne, %20, %21 : vector<1x256xi32>
    %c0_i32_7 = arith.constant 0 : i32
    %23 = vector.broadcast %c0_i32_7 : i32 to vector<1x256xi32>
    %24 = arith.cmpi slt, %20, %23 : vector<1x256xi32>
    %c0_i32_8 = arith.constant 0 : i32
    %25 = arith.cmpi slt, %18, %c0_i32_8 : i32
    %26 = vector.broadcast %25 : i1 to vector<1x256xi1>
    %27 = vector.broadcast %26 : vector<1x256xi1> to vector<1x256xi1>
    %28 = arith.xori %24, %27 : vector<1x256xi1>
    %29 = arith.andi %28, %22 : vector<1x256xi1>
    %30 = vector.broadcast %18 : i32 to vector<1x256xi32>
    %31 = arith.addi %20, %30 : vector<1x256xi32>
    %32 = arith.select %29, %31, %20 : vector<1x256xi1>, vector<1x256xi32>
    %c16_i32_9 = arith.constant 16 : i32
    %33 = vector.broadcast %c16_i32_9 : i32 to vector<1x256xi32>
    %34 = arith.cmpi sge, %16, %33 : vector<1x256xi32>
    %c240_i32 = arith.constant 240 : i32
    %35 = vector.broadcast %c240_i32 : i32 to vector<1x256xi32>
    %36 = arith.cmpi slt, %16, %35 : vector<1x256xi32>
    %c1_i32_10 = arith.constant 1 : i32
    %37 = vector.broadcast %c1_i32_10 : i32 to vector<1x256xi32>
    %38 = arith.cmpi sge, %32, %37 : vector<1x256xi32>
    %c14_i32 = arith.constant 14 : i32
    %39 = vector.broadcast %c14_i32 : i32 to vector<1x256xi32>
    %40 = arith.cmpi sle, %32, %39 : vector<1x256xi32>
    %c16_i32_11 = arith.constant 16 : i32
    %41 = tpu.dynamic_rotate %15 by %c16_i32_11 dim 1 : vector<8x256xf32>, i32 -> vector<8x256xf32>
    %cst_12 = arith.constant 0.000000e+00 : f32
    %42 = vector.shape_cast %34 : vector<1x256xi1> to vector<1x256xi1>
    %43 = vector.broadcast %42 : vector<1x256xi1> to vector<8x256xi1>
    %44 = vector.broadcast %cst_12 : f32 to vector<8x256xf32>
    %45 = arith.select %43, %41, %44 : vector<8x256xi1>, vector<8x256xf32>
    %c1_i32_13 = arith.constant 1 : i32
    %46 = tpu.dynamic_rotate %45 by %c1_i32_13 dim 1 : vector<8x256xf32>, i32 -> vector<8x256xf32>
    %cst_14 = arith.constant 0.000000e+00 : f32
    %47 = vector.shape_cast %38 : vector<1x256xi1> to vector<1x256xi1>
    %48 = vector.broadcast %47 : vector<1x256xi1> to vector<8x256xi1>
    %49 = vector.broadcast %cst_14 : f32 to vector<8x256xf32>
    %50 = arith.select %48, %46, %49 : vector<8x256xi1>, vector<8x256xf32>
    %c0_15 = arith.constant 0 : index
    %c0_16 = arith.constant 0 : index
    %51 = vector.load %arg8[%c0_15, %c0_16] : memref<72x256xf32, #tpu.memory_space<vmem>>, vector<8x256xf32>
    tpu.vector_store %arg8[%c0_15, %c0_16], %50 {strides = array<i32>} : memref<72x256xf32, #tpu.memory_space<vmem>>, vector<8x256xf32>,
    %c8 = arith.constant 8 : index
    %c0_17 = arith.constant 0 : index
    %52 = vector.load %arg8[%c8, %c0_17] : memref<72x256xf32, #tpu.memory_space<vmem>>, vector<8x256xf32>
    tpu.vector_store %arg8[%c8, %c0_17], %45 {strides = array<i32>} : memref<72x256xf32, #tpu.memory_space<vmem>>, vector<8x256xf32>,
    %c255_i32 = arith.constant 255 : i32
    %53 = tpu.dynamic_rotate %45 by %c255_i32 dim 1 : vector<8x256xf32>, i32 -> vector<8x256xf32>
    %cst_18 = arith.constant 0.000000e+00 : f32
    %54 = vector.shape_cast %40 : vector<1x256xi1> to vector<1x256xi1>
    %55 = vector.broadcast %54 : vector<1x256xi1> to vector<8x256xi1>
    %56 = vector.broadcast %cst_18 : f32 to vector<8x256xf32>
    %57 = arith.select %55, %53, %56 : vector<8x256xi1>, vector<8x256xf32>
    %c16 = arith.constant 16 : index
    %c0_19 = arith.constant 0 : index
    %58 = vector.load %arg8[%c16, %c0_19] : memref<72x256xf32, #tpu.memory_space<vmem>>, vector<8x256xf32>
    tpu.vector_store %arg8[%c16, %c0_19], %57 {strides = array<i32>} : memref<72x256xf32, #tpu.memory_space<vmem>>, vector<8x256xf32>,
    %c1_i32_20 = arith.constant 1 : i32
    %59 = tpu.dynamic_rotate %15 by %c1_i32_20 dim 1 : vector<8x256xf32>, i32 -> vector<8x256xf32>
    %cst_21 = arith.constant 0.000000e+00 : f32
    %60 = vector.shape_cast %38 : vector<1x256xi1> to vector<1x256xi1>
    %61 = vector.broadcast %60 : vector<1x256xi1> to vector<8x256xi1>
    %62 = vector.broadcast %cst_21 : f32 to vector<8x256xf32>
    %63 = arith.select %61, %59, %62 : vector<8x256xi1>, vector<8x256xf32>
    %c24 = arith.constant 24 : index
    %c0_22 = arith.constant 0 : index
    %64 = vector.load %arg8[%c24, %c0_22] : memref<72x256xf32, #tpu.memory_space<vmem>>, vector<8x256xf32>
    tpu.vector_store %arg8[%c24, %c0_22], %63 {strides = array<i32>} : memref<72x256xf32, #tpu.memory_space<vmem>>, vector<8x256xf32>,
    %c32 = arith.constant 32 : index
    %c0_23 = arith.constant 0 : index
    %65 = vector.load %arg8[%c32, %c0_23] : memref<72x256xf32, #tpu.memory_space<vmem>>, vector<8x256xf32>
    tpu.vector_store %arg8[%c32, %c0_23], %15 {strides = array<i32>} : memref<72x256xf32, #tpu.memory_space<vmem>>, vector<8x256xf32>,
    %c255_i32_24 = arith.constant 255 : i32
    %66 = tpu.dynamic_rotate %15 by %c255_i32_24 dim 1 : vector<8x256xf32>, i32 -> vector<8x256xf32>
    %cst_25 = arith.constant 0.000000e+00 : f32
    %67 = vector.shape_cast %40 : vector<1x256xi1> to vector<1x256xi1>
    %68 = vector.broadcast %67 : vector<1x256xi1> to vector<8x256xi1>
    %69 = vector.broadcast %cst_25 : f32 to vector<8x256xf32>
    %70 = arith.select %68, %66, %69 : vector<8x256xi1>, vector<8x256xf32>
    %c40 = arith.constant 40 : index
    %c0_26 = arith.constant 0 : index
    %71 = vector.load %arg8[%c40, %c0_26] : memref<72x256xf32, #tpu.memory_space<vmem>>, vector<8x256xf32>
    tpu.vector_store %arg8[%c40, %c0_26], %70 {strides = array<i32>} : memref<72x256xf32, #tpu.memory_space<vmem>>, vector<8x256xf32>,
    %c240_i32_27 = arith.constant 240 : i32
    %72 = tpu.dynamic_rotate %15 by %c240_i32_27 dim 1 : vector<8x256xf32>, i32 -> vector<8x256xf32>
    %cst_28 = arith.constant 0.000000e+00 : f32
    %73 = vector.shape_cast %36 : vector<1x256xi1> to vector<1x256xi1>
    %74 = vector.broadcast %73 : vector<1x256xi1> to vector<8x256xi1>
    %75 = vector.broadcast %cst_28 : f32 to vector<8x256xf32>
    %76 = arith.select %74, %72, %75 : vector<8x256xi1>, vector<8x256xf32>
    %c1_i32_29 = arith.constant 1 : i32
    %77 = tpu.dynamic_rotate %76 by %c1_i32_29 dim 1 : vector<8x256xf32>, i32 -> vector<8x256xf32>
    %cst_30 = arith.constant 0.000000e+00 : f32
    %78 = vector.shape_cast %38 : vector<1x256xi1> to vector<1x256xi1>
    %79 = vector.broadcast %78 : vector<1x256xi1> to vector<8x256xi1>
    %80 = vector.broadcast %cst_30 : f32 to vector<8x256xf32>
    %81 = arith.select %79, %77, %80 : vector<8x256xi1>, vector<8x256xf32>
    %c48 = arith.constant 48 : index
    %c0_31 = arith.constant 0 : index
    %82 = vector.load %arg8[%c48, %c0_31] : memref<72x256xf32, #tpu.memory_space<vmem>>, vector<8x256xf32>
    tpu.vector_store %arg8[%c48, %c0_31], %81 {strides = array<i32>} : memref<72x256xf32, #tpu.memory_space<vmem>>, vector<8x256xf32>,
    %c56 = arith.constant 56 : index
    %c0_32 = arith.constant 0 : index
    %83 = vector.load %arg8[%c56, %c0_32] : memref<72x256xf32, #tpu.memory_space<vmem>>, vector<8x256xf32>
    tpu.vector_store %arg8[%c56, %c0_32], %76 {strides = array<i32>} : memref<72x256xf32, #tpu.memory_space<vmem>>, vector<8x256xf32>,
    %c255_i32_33 = arith.constant 255 : i32
    %84 = tpu.dynamic_rotate %76 by %c255_i32_33 dim 1 : vector<8x256xf32>, i32 -> vector<8x256xf32>
    %cst_34 = arith.constant 0.000000e+00 : f32
    %85 = vector.shape_cast %40 : vector<1x256xi1> to vector<1x256xi1>
    %86 = vector.broadcast %85 : vector<1x256xi1> to vector<8x256xi1>
    %87 = vector.broadcast %cst_34 : f32 to vector<8x256xf32>
    %88 = arith.select %86, %84, %87 : vector<8x256xi1>, vector<8x256xf32>
    %c64 = arith.constant 64 : index
    %c0_35 = arith.constant 0 : index
    %89 = vector.load %arg8[%c64, %c0_35] : memref<72x256xf32, #tpu.memory_space<vmem>>, vector<8x256xf32>
    tpu.vector_store %arg8[%c64, %c0_35], %88 {strides = array<i32>} : memref<72x256xf32, #tpu.memory_space<vmem>>, vector<8x256xf32>,
    %c0_36 = arith.constant 0 : index
    %c0_37 = arith.constant 0 : index
    %90 = vector.load %arg2[%c0_36, %c0_37] : memref<16x72xf32, #tpu.memory_space<vmem>>, vector<16x72xf32>
    %c0_38 = arith.constant 0 : index
    %c0_39 = arith.constant 0 : index
    %91 = vector.load %arg8[%c0_38, %c0_39] : memref<72x256xf32, #tpu.memory_space<vmem>>, vector<72x256xf32>
    %cst_40 = arith.constant dense<0.000000e+00> : vector<16x256xf32>
    %92 = tpu.matmul %90, %91, %cst_40 {dimension_numbers = #tpu.dot_dimension_numbers<[1], [0], [0], [1], [0, 0, 1, 1], [], []>} : vector<16x72xf32>, vector<72x256xf32>, vector<16x256xf32> -> vector<16x256xf32>
    %c0_41 = arith.constant 0 : index
    %c0_42 = arith.constant 0 : index
    %93 = vector.load %arg3[%c0_41, %c0_42] : memref<16x1xf32, #tpu.memory_space<vmem>>, vector<16x1xf32>
    %94 = vector.broadcast %93 : vector<16x1xf32> to vector<16x256xf32>
    %95 = arith.addf %92, %94 : vector<16x256xf32>
    %c0_43 = arith.constant 0 : index
    %c0_44 = arith.constant 0 : index
    %96 = vector.load %arg7[%c0_43, %c0_44] : memref<16x256xf32, #tpu.memory_space<vmem>>, vector<16x256xf32>
    tpu.vector_store %arg7[%c0_43, %c0_44], %95 {strides = array<i32>} : memref<16x256xf32, #tpu.memory_space<vmem>>, vector<16x256xf32>,
    return
  }
  func.func @transform_0(%arg0: i32, %arg1: memref<3xf32, #tpu.memory_space<smem>>) -> (i32, i32) {
    %c0_i32 = arith.constant 0 : i32
    %c0_i32_0 = arith.constant 0 : i32
    %c0_i32_1 = arith.constant 0 : i32
    return %c0_i32, %c0_i32_0 : i32, i32
  }
  func.func @transform_1(%arg0: i32, %arg1: memref<3xf32, #tpu.memory_space<smem>>) -> (i32, i32) {
    %c0_i32 = arith.constant 0 : i32
    %c0_i32_0 = arith.constant 0 : i32
    %c0_i32_1 = arith.constant 0 : i32
    return %c0_i32, %c0_i32_0 : i32, i32
  }
  func.func @transform_2(%arg0: i32, %arg1: memref<3xf32, #tpu.memory_space<smem>>) -> (i32, i32) {
    %c0_i32 = arith.constant 0 : i32
    %c0_i32_0 = arith.constant 0 : i32
    return %arg0, %c0_i32 : i32, i32
  }
  func.func @transform_3(%arg0: i32, %arg1: memref<3xf32, #tpu.memory_space<smem>>) -> (i32, i32) {
    %c0_i32 = arith.constant 0 : i32
    %c0_i32_0 = arith.constant 0 : i32
    return %arg0, %c0_i32 : i32, i32
  }
  func.func @transform_4(%arg0: i32, %arg1: memref<3xf32, #tpu.memory_space<smem>>) -> (i32, i32) {
    %c0_i32 = arith.constant 0 : i32
    %c0_i32_0 = arith.constant 0 : i32
    return %arg0, %c0_i32 : i32, i32
  }
  func.func @transform_5(%arg0: i32, %arg1: memref<3xf32, #tpu.memory_space<smem>>) -> (i32, i32) {
    %c0_i32 = arith.constant 0 : i32
    %c0_i32_0 = arith.constant 0 : i32
    return %arg0, %c0_i32 : i32, i32
  }
}

</mosaic_0001>

<llo_original>
// kernel: tpu_custom_call.1
$region0: #{tpu_custom_call.1}
  #allocation0 [shape = 'u32[]', space=smem, size = 0x4, offset = 0x4, fixed_abs, tag = 'smem constant byte address 0x4 - core index']
  #allocation1 [shape = 'u32[144,128]{1,0:T(1,128)}', space=vmem, size = 0x12000, scoped, tag = 'internal scratch']
  %s0 = inlined_call_operand.hbm [shape: f32[8,256], index: 0, kind: input, shape index: {}]
  %s1 = inlined_call_operand.hbm [shape: f32[8,256], index: 1, kind: output, shape index: {}]
  %s2 = sld [smem:[#allocation0]]
  $region18: #{tpu_custom_call.1} parent=0
    _
  %s4 = ssub.s32 1, %s2
  %s5 = scalar_select 0, %s4, %s2
  $region1: #{tpu_custom_call.1} parent=0
    #allocation2 [shape = 'u8[8192]{0}', space=vmem, size = 0x2000, scoped, tag = 'input window, operand 0, single buffered']
    #allocation3 [shape = 's32[1]{0}', space=sflag, size = 0x4, scoped, tag = 'scoped memory for tpu_custom_call.1']
    #allocation4 [shape = 's32[1]{0}', space=sflag, size = 0x4, scoped, tag = 'scoped memory for tpu_custom_call.1']
    #allocation5 [shape = 'u8[8192]{0}', space=vmem, size = 0x2000, scoped, tag = 'output window, operand 0, single buffered']
    %6 = vsyncpa [#allocation3], 0
    %7 = vsyncpa [#allocation4], 0
    // Predicated region
    $region2: #{tpu_custom_call.1} parent=1 // pred_check
      _
    $region3: #{tpu_custom_call.1} parent=1 // pred_check_branch
      %9 = sbr.rel (0) target = $region5
    $region4: #{tpu_custom_call.1} parent=1 // pred_region
      %s11 = ssub.s32 256, 256
      %12 = vsyncadd [#allocation3], %s11
      %s14 = sshll.u32 [#allocation2], 4
      %s15 = int_to_ptr.vmem [resolvable:$true] %s14
      %17 = dma.hbm_to_vmem [thread:$0]  %s0, 256, %s15, [#allocation3]
    $region5: #{tpu_custom_call.1} parent=1 // pred_fallthru
      _
    // Predicated region
    $region6: #{tpu_custom_call.1} parent=1 // pred_check
      _
    $region7: #{tpu_custom_call.1} parent=1 // pred_check_branch
      %19 = sbr.rel (0) target = $region9
    $region8: #{tpu_custom_call.1} parent=1 // pred_region
      %20 = dma.done [#allocation3], 256
    $region9: #{tpu_custom_call.1} parent=1 // pred_fallthru
      _
    %v21 = vld [vmem:[#allocation2] sm:$0xff]
    %v22 = vld [vmem:[#allocation2 + $0x8] sm:$0xff]
    %23 = vrot.lane.b32.xlu0 %v21, 17
    %v24 = vpop.permute.xlu0 %23
    %25 = vrot.lane.b32.xlu0 %v22, 17
    %v26 = vpop.permute.xlu0 %25
    %v27 = vlaneseq
    %v28 = vand.u32 %v27, 127
    %vm29 = vcmp.lt.s32.totalorder %v28, 17
    %v30 = vsel %vm29, %v24, %v26
    %v31 = vsel %vm29, %v26, %v24
    %32 = vst [vmem:[#allocation5] sm:$0xff] %v31
    %33 = vst [vmem:[#allocation5 + $0x8] sm:$0xff] %v30
    // Predicated region
    $region10: #{tpu_custom_call.1} parent=1 // pred_check
      _
    $region11: #{tpu_custom_call.1} parent=1 // pred_check_branch
      %35 = sbr.rel (0) target = $region13
    $region12: #{tpu_custom_call.1} parent=1 // pred_region
      %s37 = ssub.s32 256, 256
      %38 = vsyncadd [#allocation4], %s37
      %s40 = sshll.u32 [#allocation5], 4
      %s41 = int_to_ptr.vmem [resolvable:$true] %s40
      %43 = dma.vmem_to_hbm [thread:$0]  %s41, 256, %s1, [#allocation4]
    $region13: #{tpu_custom_call.1} parent=1 // pred_fallthru
      _
    // Predicated region
    $region14: #{tpu_custom_call.1} parent=1 // pred_check
      _
    $region15: #{tpu_custom_call.1} parent=1 // pred_check_branch
      %45 = sbr.rel (0) target = $region17
    $region16: #{tpu_custom_call.1} parent=1 // pred_region
      %46 = dma.done [#allocation4], 256
    $region17: #{tpu_custom_call.1} parent=1 // pred_fallthru
      _
    %47 = vsyncpa [#allocation3], 1
    %48 = vsyncpa [#allocation4], 1

// kernel: tpu_custom_call.1
$region0: #{tpu_custom_call.1}
  #allocation0 [shape = 'u32[]', space=smem, size = 0x4, offset = 0x4, fixed_abs, tag = 'smem constant byte address 0x4 - core index']
  #allocation1 [shape = 'u32[144,128]{1,0:T(1,128)}', space=vmem, size = 0x12000, scoped, tag = 'internal scratch']
  #allocation2 [shape = 'f32[72,256]{1,0:T(8,128)}', space=vmem, size = 0x12000, scoped, tag = 'scratch operand']
  #allocation3 [shape = 's32[1]{0}', space=sflag, size = 0x4, scoped, tag = 'scoped memory for tpu_custom_call.1']
  #allocation4 [shape = 'u8[512]{0}', space=smem, size = 0x200, scoped, tag = 'prefetched SMEM operand 0']
  %s0 = inlined_call_operand.hbm [shape: f32[3], index: 0, kind: input, shape index: {}]
  %s1 = inlined_call_operand.vmem [shape: f32[16,72], index: 1, kind: input, shape index: {}]
  %s2 = inlined_call_operand.vmem [shape: f32[16,1], index: 2, kind: input, shape index: {}]
  %s3 = inlined_call_operand.hbm [shape: f32[8,256], index: 3, kind: input, shape index: {}]
  %s4 = inlined_call_operand.vmem [shape: f32[8,256], index: 4, kind: input, shape index: {}]
  %s5 = inlined_call_operand.hbm [shape: f32[8,256], index: 5, kind: input, shape index: {}]
  %s6 = inlined_call_operand.hbm [shape: f32[16,256], index: 6, kind: output, shape index: {}]
  %s7 = sld [smem:[#allocation0]]
  $region38: #{tpu_custom_call.1} parent=0
    _
  %s9 = ssub.s32 1, %s7
  %s10 = scalar_select 0, %s9, %s7
  %12 = dma.hbm_to_smem %s0, 16, [#allocation4], [#allocation3]
  %13 = dma.done [#allocation3], 16
  %14 = sfence
  $region1: #{tpu_custom_call.1} parent=0
    #allocation5 [shape = 'u8[8192]{0}', space=vmem, size = 0x2000, scoped, tag = 'input window, operand 3, single buffered']
    #allocation6 [shape = 's32[1]{0}', space=sflag, size = 0x4, scoped, tag = 'scoped memory for tpu_custom_call.1']
    #allocation7 [shape = 's32[1]{0}', space=sflag, size = 0x4, scoped, tag = 'scoped memory for tpu_custom_call.1']
    #allocation8 [shape = 'u8[8192]{0}', space=vmem, size = 0x2000, scoped, tag = 'input window, operand 5, single buffered']
    #allocation9 [shape = 's32[1]{0}', space=sflag, size = 0x4, scoped, tag = 'scoped memory for tpu_custom_call.1']
    #allocation10 [shape = 'u8[16384]{0}', space=vmem, size = 0x4000, scoped, tag = 'output window, operand 0, single buffered']
    %15 = vsyncpa [#allocation6], 0
    %16 = vsyncpa [#allocation9], 0
    %17 = vsyncpa [#allocation7], 0
    // Predicated region
    $region2: #{tpu_custom_call.1} parent=1 // pred_check
      _
    $region3: #{tpu_custom_call.1} parent=1 // pred_check_branch
      %19 = sbr.rel (0) target = $region5
    $region4: #{tpu_custom_call.1} parent=1 // pred_region
      _
    $region5: #{tpu_custom_call.1} parent=1 // pred_fallthru
      _
    // Predicated region
    $region6: #{tpu_custom_call.1} parent=1 // pred_check
      _
    $region7: #{tpu_custom_call.1} parent=1 // pred_check_branch
      %21 = sbr.rel (0) target = $region9
    $region8: #{tpu_custom_call.1} parent=1 // pred_region
      _
    $region9: #{tpu_custom_call.1} parent=1 // pred_fallthru
      _
    // Predicated region
    $region10: #{tpu_custom_call.1} parent=1 // pred_check
      _
    $region11: #{tpu_custom_call.1} parent=1 // pred_check_branch
      %23 = sbr.rel (0) target = $region13
    $region12: #{tpu_custom_call.1} parent=1 // pred_region
      %s25 = ssub.s32 256, 256
      %26 = vsyncadd [#allocation6], %s25
      %s28 = sshll.u32 [#allocation5], 4
      %s29 = int_to_ptr.vmem [resolvable:$true] %s28
      %31 = dma.hbm_to_vmem [thread:$0]  %s3, 256, %s29, [#allocation6]
    $region13: #{tpu_custom_call.1} parent=1 // pred_fallthru
      _
    // Predicated region
    $region14: #{tpu_custom_call.1} parent=1 // pred_check
      _
    $region15: #{tpu_custom_call.1} parent=1 // pred_check_branch
      %33 = sbr.rel (0) target = $region17
    $region16: #{tpu_custom_call.1} parent=1 // pred_region
      _
    $region17: #{tpu_custom_call.1} parent=1 // pred_fallthru
      _
    // Predicated region
    $region18: #{tpu_custom_call.1} parent=1 // pred_check
      _
    $region19: #{tpu_custom_call.1} parent=1 // pred_check_branch
      %35 = sbr.rel (0) target = $region21
    $region20: #{tpu_custom_call.1} parent=1 // pred_region
      %s37 = ssub.s32 256, 256
      %38 = vsyncadd [#allocation9], %s37
      %s40 = sshll.u32 [#allocation8], 4
      %s41 = int_to_ptr.vmem [resolvable:$true] %s40
      %43 = dma.hbm_to_vmem [thread:$0]  %s5, 256, %s41, [#allocation9]
    $region21: #{tpu_custom_call.1} parent=1 // pred_fallthru
      _
    // Predicated region
    $region22: #{tpu_custom_call.1} parent=1 // pred_check
      _
    $region23: #{tpu_custom_call.1} parent=1 // pred_check_branch
      %45 = sbr.rel (0) target = $region25
    $region24: #{tpu_custom_call.1} parent=1 // pred_region
      %46 = dma.done [#allocation6], 256
    $region25: #{tpu_custom_call.1} parent=1 // pred_fallthru
      _
    // Predicated region
    $region26: #{tpu_custom_call.1} parent=1 // pred_check
      _
    $region27: #{tpu_custom_call.1} parent=1 // pred_check_branch
      %48 = sbr.rel (0) target = $region29
    $region28: #{tpu_custom_call.1} parent=1 // pred_region
      %49 = dma.done [#allocation9], 256
    $region29: #{tpu_custom_call.1} parent=1 // pred_fallthru
      _
    %v50 = vld [vmem:[#allocation5] sm:$0xff]
    %v51 = vld [vmem:[#allocation5 + $0x8] sm:$0xff]
    %s52 = sld [smem:[#allocation4]]
    %v53 = vstv %s52
    %v54 = vmul.f32 %v50, %v53
    %v55 = vmul.f32 %v51, %v53
    %v56 = vld [vmem:[%s4] sm:$0xff]
    %v57 = vld [vmem:[%s4 + $0x8] sm:$0xff]
    %s58 = sld [smem:[#allocation4 + $0x1]]
    %v59 = vstv %s58
    %v60 = vmul.f32 %v56, %v59
    %v61 = vmul.f32 %v57, %v59
    %v62 = vadd.f32 %v54, %v60
    %v63 = vadd.f32 %v55, %v61
    %v64 = vld [vmem:[#allocation8] sm:$0xff]
    %v65 = vld [vmem:[#allocation8 + $0x8] sm:$0xff]
    %s66 = sld [smem:[#allocation4 + $0x2]]
    %v67 = vstv %s66
    %v68 = vmul.f32 %v64, %v67
    %v69 = vmul.f32 %v65, %v67
    %v70 = vadd.f32 %v62, %v68
    %v71 = vadd.f32 %v63, %v69
    %v72 = vmax.f32 %v70, 0.0
    %v73 = vmax.f32 %v71, 0.0
    %v74 = vlaneseq
    %v75 = vand.u32 %v74, 127
    %v76 = vadd.s32 %v75, 128
    %vm77 = vcmp.lt.s32.totalorder %v75, 0
    %v78 = vsub.s32 0, %v75
    %v79 = vsel %vm77, %v78, %v75
    %v80 = vshrl.u32 %v79, 4
    %v81 = vand.u32 %v79, 15
    %v82 = vsub.s32 0, %v81
    %v83 = vsel %vm77, %v82, %v81
    %vm84 = vcmp.lt.s32.totalorder %v76, 0
    %v85 = vsub.s32 0, %v76
    %v86 = vsel %vm84, %v85, %v76
    %v87 = vshrl.u32 %v86, 4
    %v88 = vand.u32 %v86, 15
    %v89 = vsub.s32 0, %v88
    %v90 = vsel %vm84, %v89, %v88
    %vm91 = vcmp.ne.s32.totalorder %v83, 0
    %vm92 = vcmp.ne.s32.totalorder %v90, 0
    %vm93 = vcmp.lt.s32.totalorder %v83, 0
    %vm94 = vcmp.lt.s32.totalorder %v90, 0
    %vm95 = vmand %vm93, %vm91
    %vm96 = vmand %vm94, %vm92
    %v97 = vadd.s32 %v83, 16
    %v98 = vadd.s32 %v90, 16
    %v99 = vsel %vm95, %v97, %v83
    %v100 = vsel %vm96, %v98, %v90
    %vm101 = vcmp.ge.s32.totalorder %v75, 16
    %vm102 = vcmp.ge.s32.totalorder %v76, 16
    %vm103 = vcmp.lt.s32.totalorder %v75, 240
    %vm104 = vcmp.lt.s32.totalorder %v76, 240
    %vm105 = vcmp.ge.s32.totalorder %v99, 1
    %vm106 = vcmp.ge.s32.totalorder %v100, 1
    %vm107 = vcmp.le.s32.totalorder %v99, 14
    %vm108 = vcmp.le.s32.totalorder %v100, 14
    %109 = vrot.lane.b32.xlu0 %v72, 16
    %v110 = vpop.permute.xlu0 %109
    %111 = vrot.lane.b32.xlu0 %v73, 16
    %v112 = vpop.permute.xlu0 %111
    %vm113 = vcmp.lt.s32.totalorder %v75, 16
    %v114 = vsel %vm113, %v110, %v112
    %v115 = vsel %vm113, %v112, %v110
    %v116 = vsel %vm101, 1, 0
    %v117 = vsel %vm102, 1, 0
    %vm118 = vcmp.eq.s32.totalorder %v116, 1
    %vm119 = vcmp.eq.s32.totalorder %v117, 1
    %v120 = vsel %vm118, %v115, 0.0
    %v121 = vsel %vm119, %v114, 0.0
    %122 = vrot.lane.b32.xlu0 %v120, 1
    %v123 = vpop.permute.xlu0 %122
    %124 = vrot.lane.b32.xlu0 %v121, 1
    %v125 = vpop.permute.xlu0 %124
    %vm126 = vcmp.lt.s32.totalorder %v75, 1
    %v127 = vsel %vm126, %v123, %v125
    %v128 = vsel %vm126, %v125, %v123
    %v129 = vsel %vm105, 1, 0
    %v130 = vsel %vm106, 1, 0
    %vm131 = vcmp.eq.s32.totalorder %v129, 1
    %vm132 = vcmp.eq.s32.totalorder %v130, 1
    %v133 = vsel %vm131, %v128, 0.0
    %v134 = vsel %vm132, %v127, 0.0
    %135 = vst [vmem:[#allocation2] sm:$0xff] %v133
    %136 = vst [vmem:[#allocation2 + $0x8] sm:$0xff] %v134
    %137 = vst [vmem:[#allocation2 + $0x10] sm:$0xff] %v120
    %138 = vst [vmem:[#allocation2 + $0x18] sm:$0xff] %v121
    %139 = vrot.lane.b32.xlu0 %v120, 127
    %v140 = vpop.permute.xlu0 %139
    %141 = vrot.lane.b32.xlu0 %v121, 127
    %v142 = vpop.permute.xlu0 %141
    %vm143 = vcmp.lt.s32.totalorder %v75, 127
    %v144 = vsel %vm143, %v140, %v142
    %v145 = vsel %vm143, %v142, %v140
    %v146 = vsel %vm107, 1, 0
    %v147 = vsel %vm108, 1, 0
    %vm148 = vcmp.eq.s32.totalorder %v146, 1
    %vm149 = vcmp.eq.s32.totalorder %v147, 1
    %v150 = vsel %vm148, %v144, 0.0
    %v151 = vsel %vm149, %v145, 0.0
    %152 = vst [vmem:[#allocation2 + $0x20] sm:$0xff] %v150
    %153 = vst [vmem:[#allocation2 + $0x28] sm:$0xff] %v151
    %154 = vrot.lane.b32.xlu0 %v72, 1
    %v155 = vpop.permute.xlu0 %154
    %156 = vrot.lane.b32.xlu0 %v73, 1
    %v157 = vpop.permute.xlu0 %156
    %v158 = vsel %vm126, %v155, %v157
    %v159 = vsel %vm126, %v157, %v155
    %v160 = vsel %vm131, %v159, 0.0
    %v161 = vsel %vm132, %v158, 0.0
    %162 = vst [vmem:[#allocation2 + $0x30] sm:$0xff] %v160
    %163 = vst [vmem:[#allocation2 + $0x38] sm:$0xff] %v161
    %164 = vst [vmem:[#allocation2 + $0x40] sm:$0xff] %v72
    %165 = vst [vmem:[#allocation2 + $0x48] sm:$0xff] %v73
    %166 = vrot.lane.b32.xlu0 %v72, 127
    %v167 = vpop.permute.xlu0 %166
    %168 = vrot.lane.b32.xlu0 %v73, 127
    %v169 = vpop.permute.xlu0 %168
    %v170 = vsel %vm143, %v167, %v169
    %v171 = vsel %vm143, %v169, %v167
    %v172 = vsel %vm148, %v170, 0.0
    %v173 = vsel %vm149, %v171, 0.0
    %174 = vst [vmem:[#allocation2 + $0x50] sm:$0xff] %v172
    %175 = vst [vmem:[#allocation2 + $0x58] sm:$0xff] %v173
    %176 = vrot.lane.b32.xlu0 %v72, 112
    %v177 = vpop.permute.xlu0 %176
    %178 = vrot.lane.b32.xlu0 %v73, 112
    %v179 = vpop.permute.xlu0 %178
    %vm180 = vcmp.lt.s32.totalorder %v75, 112
    %v181 = vsel %vm180, %v177, %v179
    %v182 = vsel %vm180, %v179, %v177
    %v183 = vsel %vm103, 1, 0
    %v184 = vsel %vm104, 1, 0
    %vm185 = vcmp.eq.s32.totalorder %v183, 1
    %vm186 = vcmp.eq.s32.totalorder %v184, 1
    %v187 = vsel %vm185, %v181, 0.0
    %v188 = vsel %vm186, %v182, 0.0
    %189 = vrot.lane.b32.xlu0 %v187, 1
    %v190 = vpop.permute.xlu0 %189
    %191 = vrot.lane.b32.xlu0 %v188, 1
    %v192 = vpop.permute.xlu0 %191
    %v193 = vsel %vm126, %v190, %v192
    %v194 = vsel %vm126, %v192, %v190
    %v195 = vsel %vm131, %v194, 0.0
    %v196 = vsel %vm132, %v193, 0.0
    %197 = vst [vmem:[#allocation2 + $0x60] sm:$0xff] %v195
    %198 = vst [vmem:[#allocation2 + $0x68] sm:$0xff] %v196
    %199 = vst [vmem:[#allocation2 + $0x70] sm:$0xff] %v187
    %200 = vst [vmem:[#allocation2 + $0x78] sm:$0xff] %v188
    %201 = vrot.lane.b32.xlu0 %v187, 127
    %v202 = vpop.permute.xlu0 %201
    %203 = vrot.lane.b32.xlu0 %v188, 127
    %v204 = vpop.permute.xlu0 %203
    %v205 = vsel %vm143, %v202, %v204
    %v206 = vsel %vm143, %v204, %v202
    %v207 = vsel %vm148, %v205, 0.0
    %v208 = vsel %vm149, %v206, 0.0
    %209 = vst [vmem:[#allocation2 + $0x80] sm:$0xff] %v207
    %210 = vst [vmem:[#allocation2 + $0x88] sm:$0xff] %v208
    %v211 = vld [vmem:[%s1] sm:$0xff]
    %v212 = vld [vmem:[%s1 + $0x8] sm:$0xff]
    %v213 = vld [vmem:[#allocation2] sm:$0xff]
    %v214 = vld [vmem:[#allocation2 + $0x8] sm:$0xff]
    %v215 = vld [vmem:[#allocation2 + $0x10] sm:$0xff]
    %v216 = vld [vmem:[#allocation2 + $0x18] sm:$0xff]
    %v217 = vld [vmem:[#allocation2 + $0x20] sm:$0xff]
    %v218 = vld [vmem:[#allocation2 + $0x28] sm:$0xff]
    %v219 = vld [vmem:[#allocation2 + $0x30] sm:$0xff]
    %v220 = vld [vmem:[#allocation2 + $0x38] sm:$0xff]
    %v221 = vld [vmem:[#allocation2 + $0x40] sm:$0xff]
    %v222 = vld [vmem:[#allocation2 + $0x48] sm:$0xff]
    %v223 = vld [vmem:[#allocation2 + $0x50] sm:$0xff]
    %v224 = vld [vmem:[#allocation2 + $0x58] sm:$0xff]
    %v225 = vld [vmem:[#allocation2 + $0x60] sm:$0xff]
    %v226 = vld [vmem:[#allocation2 + $0x68] sm:$0xff]
    %v227 = vld [vmem:[#allocation2 + $0x70] sm:$0xff]
    %v228 = vld [vmem:[#allocation2 + $0x78] sm:$0xff]
    %v229 = vld [vmem:[#allocation2 + $0x80] sm:$0xff]
    %v230 = vld [vmem:[#allocation2 + $0x88] sm:$0xff]
    %v231 = vld [vmem:[%s2] sm:$0xff]
    %v232 = vld [vmem:[%s2 + $0x8] sm:$0xff]
    %234 = vset.pattern.permute.xlu0 0
    %235 = vperm.xlu0 %234, %v231
    %v236 = vpop.permute.xlu0 %235
    %239 = vset.pattern.permute.xlu0 0
    %240 = vperm.xlu0 %239, %v232
    %v241 = vpop.permute.xlu0 %240
    %vm243 = vcmask 588800
    %v245 = vsel %vm243, %v211, 0
    %v248 = vsel %vm243, %v212, 0
    %250 = vmatprep.subr.mxu0 %v214
    %251 = vmatpush1.msra.mxu0 %v213
    %252 = vmatprep.subr.mxu0 %v216
    %253 = vmatpush1.msra.mxu0 %v215
    %254 = vmatprep.subr.mxu0 %v218
    %255 = vmatpush1.msra.mxu0 %v217
    %256 = vmatprep.subr.mxu0 %v220
    %257 = vmatpush1.msra.mxu0 %v219
    %258 = vmatprep.subr.mxu0 %v222
    %259 = vmatpush1.msra.mxu0 %v221
    %260 = vmatprep.subr.mxu0 %v224
    %261 = vmatpush1.msra.mxu0 %v223
    %262 = vmatprep.subr.mxu0 %v226
    %263 = vmatpush1.msra.mxu0 %v225
    %264 = vmatprep.subr.mxu0 %v228
    %265 = vmatpush1.msra.mxu0 %v227
    %266 = vmatprep.subr.mxu0 %v230
    %267 = vmatpush1.msra.mxu0 %v229
    %268 = vmatprep.subr.mxu0 0.0
    %269 = vmatpush1.msra.mxu0 0.0
    %270 = vmatprep.subr.mxu0 0.0
    %271 = vmatpush1.msra.mxu0 0.0
    %272 = vmatprep.subr.mxu0 0.0
    %273 = vmatpush1.msra.mxu0 0.0
    %274 = vmatprep.subr.mxu0 0.0
    %275 = vmatpush1.msra.mxu0 0.0
    %276 = vmatprep.subr.mxu0 0.0
    %277 = vmatpush1.msra.mxu0 0.0
    %278 = vmatprep.subr.mxu0 0.0
    %279 = vmatpush1.msra.mxu0 0.0
    %280 = vmatprep.subr.mxu0 0.0
    %281 = vmatpush1.msra.mxu0 0.0
    %282 = vmatprep.subr.mxu0 0.0
    %283 = vmatpush1.msra.mxu0 0.0
    %284 = vmatprep.subr.mxu0 0.0
    %285 = vmatpush1.msra.mxu0 0.0
    %286 = vmatprep.subr.mxu0 0.0
    %287 = vmatpush1.msra.mxu0 0.0
    %288 = vmatprep.subr.mxu0 0.0
    %289 = vmatpush1.msra.mxu0 0.0
    %290 = vmatprep.subr.mxu0 0.0
    %291 = vmatpush1.msra.mxu0 0.0
    %292 = vmatprep.subr.mxu0 0.0
    %293 = vmatpush1.msra.mxu0 0.0
    %294 = vmatprep.subr.mxu0 0.0
    %295 = vmatpush1.msra.mxu0 0.0
    %296 = vmatprep.subr.mxu0 0.0
    %297 = vmatpush1.msra.mxu0 0.0
    %298 = vmatprep.subr.mxu0 0.0
    %299 = vmatpush1.msra.mxu0 0.0
    %300 = vmatprep.subr.mxu0 0.0
    %301 = vmatpush1.msra.mxu0 0.0
    %302 = vmatprep.subr.mxu0 0.0
    %303 = vmatpush1.msra.mxu0 0.0
    %304 = vmatprep.subr.mxu0 0.0
    %305 = vmatpush1.msra.mxu0 0.0
    %306 = vmatprep.subr.mxu0 0.0
    %307 = vmatpush1.msra.mxu0 0.0
    %308 = vmatprep.subr.mxu0 0.0
    %309 = vmatpush1.msra.mxu0 0.0
    %310 = vmatprep.subr.mxu0 0.0
    %311 = vmatpush1.msra.mxu0 0.0
    %312 = vmatprep.subr.mxu0 0.0
    %313 = vmatpush1.msra.mxu0 0.0
    %314 = vmatprep.mubr.f32.mxu0 0.0
    %315 = vmatmul.mubr.f32.gmra.mrb[0].mxu0 %v245
    %v316 = vpop.f32.mrb[0].mxu0
    %v317 = vadd.f32 %v236, %v316
    %v318 = vpop.f32.mrb[0].mxu0
    %v319 = vadd.f32 %v236, %v318
    %320 = vmatprep.mubr.f32.mxu0 0.0
    %321 = vmatmul.mubr.f32.gmra.mrb[0].mxu0 %v248
    %v322 = vpop.f32.mrb[0].mxu0
    %v323 = vadd.f32 %v241, %v322
    %v324 = vpop.f32.mrb[0].mxu0
    %v325 = vadd.f32 %v241, %v324
    %326 = vdwg.mxu0
    %327 = vst [vmem:[#allocation10] sm:$0xff] %v317
    %328 = vst [vmem:[#allocation10 + $0x8] sm:$0xff] %v319
    %329 = vst [vmem:[#allocation10 + $0x10] sm:$0xff] %v323
    %330 = vst [vmem:[#allocation10 + $0x18] sm:$0xff] %v325
    // Predicated region
    $region30: #{tpu_custom_call.1} parent=1 // pred_check
      _
    $region31: #{tpu_custom_call.1} parent=1 // pred_check_branch
      %332 = sbr.rel (0) target = $region33
    $region32: #{tpu_custom_call.1} parent=1 // pred_region
      %s334 = ssub.s32 512, 512
      %335 = vsyncadd [#allocation7], %s334
      %s336 = sshll.u32 [#allocation10], 4
      %s337 = int_to_ptr.vmem [resolvable:$true] %s336
      %342 = dma.vmem_to_hbm [thread:$0]  %s337, 512, %s6, [#allocation7], 256, 256, 16
    $region33: #{tpu_custom_call.1} parent=1 // pred_fallthru
      _
    // Predicated region
    $region34: #{tpu_custom_call.1} parent=1 // pred_check
      _
    $region35: #{tpu_custom_call.1} parent=1 // pred_check_branch
      %344 = sbr.rel (0) target = $region37
    $region36: #{tpu_custom_call.1} parent=1 // pred_region
      %345 = dma.done [#allocation7], 512
    $region37: #{tpu_custom_call.1} parent=1 // pred_fallthru
      _
    %346 = vsyncpa [#allocation6], 1
    %347 = vsyncpa [#allocation9], 1
    %348 = vsyncpa [#allocation7], 1

</llo_original>
